<compile_context>
chip_gen: v7x
topology: tpu7x:2x2x1
jax: 0.10.0
libtpu: 0.0.40
codegen_flags: <defaults>
</compile_context>

<pallas_src>
import jax
import jax.numpy as jnp
from jax.experimental import pallas as pl
from jax.experimental.pallas import tpu as pltpu

HIDDEN = 64        # logical hidden width of the PyTorch model
HIDDEN_PAD = 128   # padded to a full 128-lane vreg / MXU width


def _round_up(n, m):
    return ((n + m - 1) // m) * m


def _c51_mlp_kernel(x_ref, w1_ref, b1_ref, w2_ref, b2_ref, w3_ref, b3_ref, out_ref):
    # bf16 operands, f32 accumulation on the MXU; bias-add + ReLU in f32
    # (safe on v5e, which has no bf16 VPU path).  Final store is bf16.
    x = x_ref[...]                                                     # (TB, IN) bf16
    h1 = jnp.dot(x, w1_ref[...], preferred_element_type=jnp.float32) + b1_ref[...]
    h1 = jnp.maximum(h1, 0.0).astype(jnp.bfloat16)                     # (TB, 128)
    h2 = jnp.dot(h1, w2_ref[...], preferred_element_type=jnp.float32) + b2_ref[...]
    h2 = jnp.maximum(h2, 0.0).astype(jnp.bfloat16)                     # (TB, 128)
    y = jnp.dot(h2, w3_ref[...], preferred_element_type=jnp.float32) + b3_ref[...]
    out_ref[...] = y.astype(out_ref.dtype)                             # (TB, 204) bf16


def c51_forward(x, params, output_size, n_atoms, *, block_batch=1024):
    """Replicates C51Model.forward. Returns shape (output_size, batch, n_atoms)."""
    w1, b1, w2, b2, w3, b3 = params      # weights bf16 (hidden dims padded), biases f32
    batch, in_dim = x.shape
    out_dim = output_size * n_atoms
    hid = w1.shape[1]                    # HIDDEN_PAD
    assert w3.shape[1] == out_dim

    # Pad the batch only to the bf16 sublane tile (16), never to a full block.
    padded_batch = _round_up(batch, 16)
    if padded_batch <= 16:
        bb = padded_batch                                   # one tiny tile
    elif padded_batch <= 2 * block_batch:
        bb = _round_up(pl.cdiv(padded_batch, 2), 16)        # >=2 steps -> v7x megacore
    else:
        bb = block_batch                                    # large batch: big tiles
    grid = (pl.cdiv(padded_batch, bb),)

    if padded_batch != batch:
        x = jnp.pad(x, ((0, padded_batch - batch), (0, 0)))
    x = x.astype(jnp.bfloat16)

    flops = 2 * padded_batch * (in_dim * hid + hid * hid + hid * out_dim)
    bytes_accessed = (
        x.size * 2
        + (w1.size + w2.size + w3.size) * 2
        + (b1.size + b2.size + b3.size) * 4
        + padded_batch * out_dim * 2                        # bf16 writeback
    )

    logits = pl.pallas_call(
        _c51_mlp_kernel,
        out_shape=jax.ShapeDtypeStruct((padded_batch, out_dim), jnp.bfloat16),
        grid=grid,
        in_specs=[
            pl.BlockSpec((bb, in_dim), lambda i: (i, 0)),   # x: tiled over batch
            pl.BlockSpec(w1.shape, lambda i: (0, 0)),       # weights / biases:
            pl.BlockSpec(b1.shape, lambda i: (0, 0)),       # constant index_map ->
            pl.BlockSpec(w2.shape, lambda i: (0, 0)),       # resident in VMEM
            pl.BlockSpec(b2.shape, lambda i: (0, 0)),       # across all grid steps
            pl.BlockSpec(w3.shape, lambda i: (0, 0)),
            pl.BlockSpec(b3.shape, lambda i: (0, 0)),
        ],
        out_specs=pl.BlockSpec((bb, out_dim), lambda i: (i, 0)),
        compiler_params=pltpu.CompilerParams(
            dimension_semantics=("parallel",)),
        cost_estimate=pl.CostEstimate(
            flops=flops, transcendentals=0, bytes_accessed=bytes_accessed),
    )(x, w1, b1, w2, b2, w3, b3)

    # Drop the (small) batch padding; columns are already exactly out_dim.
    if padded_batch != batch:
        logits = logits[:batch]
    # Faithful reproduction of `self.fc3(x).view(-1, len(x), self.n_atoms)`:
    # len(x) is the batch size (x was rebound to the fc2 activation).
    return logits.reshape(output_size, batch, n_atoms)


def init_params(key, input_size, output_size, n_atoms):
    """Synthetic nn.Linear-style init. Weights stored pre-transposed (in, out);
    hidden dims zero-padded to 128 lanes and cast to bf16; biases stay f32.
    fc3 keeps its logical output width (output_size*n_atoms) so the kernel
    writes no padding columns."""
    ks = jax.random.split(key, 6)
    out_dim = output_size * n_atoms

    def lin(kw, kb, fan_in, fan_out, rows_pad, cols_pad):
        bound = 1.0 / jnp.sqrt(fan_in)
        w = jax.random.uniform(kw, (fan_in, fan_out), jnp.float32, -bound, bound)
        b = jax.random.uniform(kb, (1, fan_out), jnp.float32, -bound, bound)
        w = jnp.pad(w, ((0, rows_pad - fan_in), (0, cols_pad - fan_out)))
        b = jnp.pad(b, ((0, 0), (0, cols_pad - fan_out)))
        return w.astype(jnp.bfloat16), b

    w1, b1 = lin(ks[0], ks[1], input_size, HIDDEN, input_size, HIDDEN_PAD)
    w2, b2 = lin(ks[2], ks[3], HIDDEN, HIDDEN, HIDDEN_PAD, HIDDEN_PAD)
    w3, b3 = lin(ks[4], ks[5], HIDDEN, out_dim, HIDDEN_PAD, out_dim)
    return (w1, b1, w2, b2, w3, b3)


if __name__ == "__main__":
    input_size = 8       # CartPole-ish observation dim
    output_size = 4      # number of actions
    n_atoms = 51
    batch = 2            # small demo batch; kernel pads batch only to 16 rows

    key = jax.random.PRNGKey(0)
    kx, kp = jax.random.split(key)
    x = jax.random.normal(kx, (batch, input_size), dtype=jnp.float32)
    params = init_params(kp, input_size, output_size, n_atoms)

    out = c51_forward(x, params, output_size, n_atoms)
    out = jax.block_until_ready(out)
    assert out.shape == (output_size, batch, n_atoms)
    assert out.dtype == jnp.bfloat16

    # Pure-JAX reference with identical numerics (bf16 operands, f32 accumulate,
    # bf16 final cast).
    w1, b1, w2, b2, w3, b3 = params
    xb = x.astype(jnp.bfloat16)
    h1 = jnp.maximum(jnp.dot(xb, w1, preferred_element_type=jnp.float32) + b1, 0.0)
    h1 = h1.astype(jnp.bfloat16)
    h2 = jnp.maximum(jnp.dot(h1, w2, preferred_element_type=jnp.float32) + b2, 0.0)
    h2 = h2.astype(jnp.bfloat16)
    ref = (jnp.dot(h2, w3, preferred_element_type=jnp.float32) + b3).astype(jnp.bfloat16)
    ref = ref.reshape(output_size, batch, n_atoms)

    out_f = out.astype(jnp.float32)
    ref_f = ref.astype(jnp.float32)
    err = float(jnp.max(jnp.abs(out_f - ref_f)))
    assert jnp.allclose(out_f, ref_f, atol=2e-2, rtol=2e-2), err

    print("KERNEL_OK")
</pallas_src>

<mosaic_0001>
module attributes {stable_mosaic.version = 11 : i64} {
  func.func @_c51_mlp_kernel(%arg0: i32, %arg1: memref<16x8xbf16, #tpu.memory_space<vmem>>, %arg2: memref<8x128xbf16, #tpu.memory_space<vmem>>, %arg3: memref<1x128xf32, #tpu.memory_space<vmem>>, %arg4: memref<128x128xbf16, #tpu.memory_space<vmem>>, %arg5: memref<1x128xf32, #tpu.memory_space<vmem>>, %arg6: memref<128x204xbf16, #tpu.memory_space<vmem>>, %arg7: memref<1x204xf32, #tpu.memory_space<vmem>>, %arg8: memref<16x204xbf16, #tpu.memory_space<vmem>>) attributes {dimension_semantics = [#tpu.dimension_semantics<parallel>], iteration_bounds = array<i64: 1>, scalar_prefetch = 0 : i64, scratch_operands = 0 : i64, tpu.core_type = #tpu.core_type<tc>, window_params = [{transform_indices = @transform_0, window_bounds = array<i64: 16, 8>}, {pipeline_mode = #tpu.pipeline_mode<synchronous>, transform_indices = @transform_1, window_bounds = array<i64: 8, 128>}, {pipeline_mode = #tpu.pipeline_mode<synchronous>, transform_indices = @transform_2, window_bounds = array<i64: 1, 128>}, {pipeline_mode = #tpu.pipeline_mode<synchronous>, transform_indices = @transform_3, window_bounds = array<i64: 128, 128>}, {pipeline_mode = #tpu.pipeline_mode<synchronous>, transform_indices = @transform_4, window_bounds = array<i64: 1, 128>}, {pipeline_mode = #tpu.pipeline_mode<synchronous>, transform_indices = @transform_5, window_bounds = array<i64: 128, 204>}, {pipeline_mode = #tpu.pipeline_mode<synchronous>, transform_indices = @transform_6, window_bounds = array<i64: 1, 204>}, {transform_indices = @transform_7, window_bounds = array<i64: 16, 204>}]} {
    %c0 = arith.constant 0 : index
    %c0_0 = arith.constant 0 : index
    %0 = vector.load %arg1[%c0, %c0_0] : memref<16x8xbf16, #tpu.memory_space<vmem>>, vector<16x8xbf16>
    %c0_1 = arith.constant 0 : index
    %c0_2 = arith.constant 0 : index
    %1 = vector.load %arg2[%c0_1, %c0_2] : memref<8x128xbf16, #tpu.memory_space<vmem>>, vector<8x128xbf16>
    %cst = arith.constant dense<0.000000e+00> : vector<16x128xf32>
    %2 = tpu.matmul %0, %1, %cst {dimension_numbers = #tpu.dot_dimension_numbers<[1], [0], [0], [1], [0, 0, 1, 1], [], []>} : vector<16x8xbf16>, vector<8x128xbf16>, vector<16x128xf32> -> vector<16x128xf32>
    %c0_3 = arith.constant 0 : index
    %c0_4 = arith.constant 0 : index
    %3 = vector.load %arg3[%c0_3, %c0_4] : memref<1x128xf32, #tpu.memory_space<vmem>>, vector<1x128xf32>
    %4 = vector.broadcast %3 : vector<1x128xf32> to vector<16x128xf32>
    %5 = arith.addf %2, %4 : vector<16x128xf32>
    %cst_5 = arith.constant 0.000000e+00 : f32
    %6 = vector.broadcast %cst_5 : f32 to vector<16x128xf32>
    %7 = arith.maximumf %5, %6 : vector<16x128xf32>
    %8 = arith.truncf %7 : vector<16x128xf32> to vector<16x128xbf16>
    %c0_6 = arith.constant 0 : index
    %c0_7 = arith.constant 0 : index
    %9 = vector.load %arg4[%c0_6, %c0_7] : memref<128x128xbf16, #tpu.memory_space<vmem>>, vector<128x128xbf16>
    %cst_8 = arith.constant dense<0.000000e+00> : vector<16x128xf32>
    %10 = tpu.matmul %8, %9, %cst_8 {dimension_numbers = #tpu.dot_dimension_numbers<[1], [0], [0], [1], [0, 0, 1, 1], [], []>} : vector<16x128xbf16>, vector<128x128xbf16>, vector<16x128xf32> -> vector<16x128xf32>
    %c0_9 = arith.constant 0 : index
    %c0_10 = arith.constant 0 : index
    %11 = vector.load %arg5[%c0_9, %c0_10] : memref<1x128xf32, #tpu.memory_space<vmem>>, vector<1x128xf32>
    %12 = vector.broadcast %11 : vector<1x128xf32> to vector<16x128xf32>
    %13 = arith.addf %10, %12 : vector<16x128xf32>
    %cst_11 = arith.constant 0.000000e+00 : f32
    %14 = vector.broadcast %cst_11 : f32 to vector<16x128xf32>
    %15 = arith.maximumf %13, %14 : vector<16x128xf32>
    %16 = arith.truncf %15 : vector<16x128xf32> to vector<16x128xbf16>
    %c0_12 = arith.constant 0 : index
    %c0_13 = arith.constant 0 : index
    %17 = vector.load %arg6[%c0_12, %c0_13] : memref<128x204xbf16, #tpu.memory_space<vmem>>, vector<128x204xbf16>
    %cst_14 = arith.constant dense<0.000000e+00> : vector<16x204xf32>
    %18 = tpu.matmul %16, %17, %cst_14 {dimension_numbers = #tpu.dot_dimension_numbers<[1], [0], [0], [1], [0, 0, 1, 1], [], []>} : vector<16x128xbf16>, vector<128x204xbf16>, vector<16x204xf32> -> vector<16x204xf32>
    %c0_15 = arith.constant 0 : index
    %c0_16 = arith.constant 0 : index
    %19 = vector.load %arg7[%c0_15, %c0_16] : memref<1x204xf32, #tpu.memory_space<vmem>>, vector<1x204xf32>
    %20 = vector.broadcast %19 : vector<1x204xf32> to vector<16x204xf32>
    %21 = arith.addf %18, %20 : vector<16x204xf32>
    %22 = arith.truncf %21 : vector<16x204xf32> to vector<16x204xbf16>
    %c0_17 = arith.constant 0 : index
    %c0_18 = arith.constant 0 : index
    %23 = vector.load %arg8[%c0_17, %c0_18] : memref<16x204xbf16, #tpu.memory_space<vmem>>, vector<16x204xbf16>
    tpu.vector_store %arg8[%c0_17, %c0_18], %22 {strides = array<i32>} : memref<16x204xbf16, #tpu.memory_space<vmem>>, vector<16x204xbf16>,
    return
  }
  func.func @transform_0(%arg0: i32) -> (i32, i32) {
    %c0_i32 = arith.constant 0 : i32
    %c0_i32_0 = arith.constant 0 : i32
    return %arg0, %c0_i32 : i32, i32
  }
  func.func @transform_1(%arg0: i32) -> (i32, i32) {
    %c0_i32 = arith.constant 0 : i32
    %c0_i32_0 = arith.constant 0 : i32
    %c0_i32_1 = arith.constant 0 : i32
    return %c0_i32, %c0_i32_0 : i32, i32
  }
  func.func @transform_2(%arg0: i32) -> (i32, i32) {
    %c0_i32 = arith.constant 0 : i32
    %c0_i32_0 = arith.constant 0 : i32
    %c0_i32_1 = arith.constant 0 : i32
    return %c0_i32, %c0_i32_0 : i32, i32
  }
  func.func @transform_3(%arg0: i32) -> (i32, i32) {
    %c0_i32 = arith.constant 0 : i32
    %c0_i32_0 = arith.constant 0 : i32
    %c0_i32_1 = arith.constant 0 : i32
    return %c0_i32, %c0_i32_0 : i32, i32
  }
  func.func @transform_4(%arg0: i32) -> (i32, i32) {
    %c0_i32 = arith.constant 0 : i32
    %c0_i32_0 = arith.constant 0 : i32
    %c0_i32_1 = arith.constant 0 : i32
    return %c0_i32, %c0_i32_0 : i32, i32
  }
  func.func @transform_5(%arg0: i32) -> (i32, i32) {
    %c0_i32 = arith.constant 0 : i32
    %c0_i32_0 = arith.constant 0 : i32
    %c0_i32_1 = arith.constant 0 : i32
    return %c0_i32, %c0_i32_0 : i32, i32
  }
  func.func @transform_6(%arg0: i32) -> (i32, i32) {
    %c0_i32 = arith.constant 0 : i32
    %c0_i32_0 = arith.constant 0 : i32
    %c0_i32_1 = arith.constant 0 : i32
    return %c0_i32, %c0_i32_0 : i32, i32
  }
  func.func @transform_7(%arg0: i32) -> (i32, i32) {
    %c0_i32 = arith.constant 0 : i32
    %c0_i32_0 = arith.constant 0 : i32
    return %arg0, %c0_i32 : i32, i32
  }
}

</mosaic_0001>

<llo_original>
// kernel: tpu_custom_call.1
$region0: #{tpu_custom_call.1}
  #allocation0 [shape = 'u32[]', space=smem, size = 0x4, offset = 0x4, fixed_abs, tag = 'smem constant byte address 0x4 - core index']
  #allocation1 [shape = 'u32[144,128]{1,0:T(1,128)}', space=vmem, size = 0x12000, scoped, tag = 'internal scratch']
  %s0 = inlined_call_operand.vmem [shape: bf16[16,8], index: 0, kind: input, shape index: {}]
  %s1 = inlined_call_operand.vmem [shape: bf16[8,128], index: 1, kind: input, shape index: {}]
  %s2 = inlined_call_operand.vmem [shape: f32[1,128], index: 2, kind: input, shape index: {}]
  %s3 = inlined_call_operand.vmem [shape: bf16[128,128], index: 3, kind: input, shape index: {}]
  %s4 = inlined_call_operand.vmem [shape: f32[1,128], index: 4, kind: input, shape index: {}]
  %s5 = inlined_call_operand.vmem [shape: bf16[128,204], index: 5, kind: input, shape index: {}]
  %s6 = inlined_call_operand.vmem [shape: f32[1,204], index: 6, kind: input, shape index: {}]
  %s7 = inlined_call_operand.hbm [shape: bf16[16,204], index: 7, kind: output, shape index: {}]
  %s8 = sld [smem:[#allocation0]]
  $region38: #{tpu_custom_call.1} parent=0
    _
  %s10 = ssub.s32 1, %s8
  %s11 = scalar_select 0, %s10, %s8
  $region1: #{tpu_custom_call.1} parent=0
    #allocation2 [shape = 'u8[8192]{0}', space=vmem, size = 0x2000, scoped, tag = 'output window, operand 0, single buffered']
    #allocation3 [shape = 's32[1]{0}', space=sflag, size = 0x4, scoped, tag = 'scoped memory for tpu_custom_call.1']
    %12 = vsyncpa [#allocation3], 0
    // Predicated region
    $region2: #{tpu_custom_call.1} parent=1 // pred_check
      _
    $region3: #{tpu_custom_call.1} parent=1 // pred_check_branch
      %14 = sbr.rel (0) target = $region5
    $region4: #{tpu_custom_call.1} parent=1 // pred_region
      _
    $region5: #{tpu_custom_call.1} parent=1 // pred_fallthru
      _
    // Predicated region
    $region6: #{tpu_custom_call.1} parent=1 // pred_check
      _
    $region7: #{tpu_custom_call.1} parent=1 // pred_check_branch
      %16 = sbr.rel (0) target = $region9
    $region8: #{tpu_custom_call.1} parent=1 // pred_region
      _
    $region9: #{tpu_custom_call.1} parent=1 // pred_fallthru
      _
    // Predicated region
    $region10: #{tpu_custom_call.1} parent=1 // pred_check
      _
    $region11: #{tpu_custom_call.1} parent=1 // pred_check_branch
      %18 = sbr.rel (0) target = $region13
    $region12: #{tpu_custom_call.1} parent=1 // pred_region
      _
    $region13: #{tpu_custom_call.1} parent=1 // pred_fallthru
      _
    // Predicated region
    $region14: #{tpu_custom_call.1} parent=1 // pred_check
      _
    $region15: #{tpu_custom_call.1} parent=1 // pred_check_branch
      %20 = sbr.rel (0) target = $region17
    $region16: #{tpu_custom_call.1} parent=1 // pred_region
      _
    $region17: #{tpu_custom_call.1} parent=1 // pred_fallthru
      _
    // Predicated region
    $region18: #{tpu_custom_call.1} parent=1 // pred_check
      _
    $region19: #{tpu_custom_call.1} parent=1 // pred_check_branch
      %22 = sbr.rel (0) target = $region21
    $region20: #{tpu_custom_call.1} parent=1 // pred_region
      _
    $region21: #{tpu_custom_call.1} parent=1 // pred_fallthru
      _
    // Predicated region
    $region22: #{tpu_custom_call.1} parent=1 // pred_check
      _
    $region23: #{tpu_custom_call.1} parent=1 // pred_check_branch
      %24 = sbr.rel (0) target = $region25
    $region24: #{tpu_custom_call.1} parent=1 // pred_region
      _
    $region25: #{tpu_custom_call.1} parent=1 // pred_fallthru
      _
    // Predicated region
    $region26: #{tpu_custom_call.1} parent=1 // pred_check
      _
    $region27: #{tpu_custom_call.1} parent=1 // pred_check_branch
      %26 = sbr.rel (0) target = $region29
    $region28: #{tpu_custom_call.1} parent=1 // pred_region
      _
    $region29: #{tpu_custom_call.1} parent=1 // pred_fallthru
      _
    %v28 = vld [vmem:[%s0] sm:$0xf]
    %v29 = vld [vmem:[%s0 + $0x4] sm:$0xf]
    %v30 = vld [vmem:[%s1] sm:$0xf]
    %v31 = vld [vmem:[%s2] sm:$0x1]
    %v33 = vlaneseq
    %v34 = vshrl.u32 %v33, 7
    %v35 = vsub.s32 0, %v34
    %v36 = vrot.slane %v31, %v35
    %v40 = vunpack.c.l.b16 %v28
    %v41 = vunpack.c.l.b16 %v29
    %v42 = vpack.c.b16 %v41, %v40
    %vm43 = vcmask 64512
    %v45 = vsel %vm43, %v42, 0
    %vm47 = vcmask 1043456
    %v49 = vsel %vm47, %v30, 0
    %51 = vmatprep.subr.bf16.mxu0 0
    %52 = vmatpush1.bf16.msra.mxu0 %v49
    %53 = vmatprep.subr.bf16.mxu0 0
    %54 = vmatpush1.bf16.msra.mxu0 0
    %55 = vmatprep.subr.bf16.mxu0 0
    %56 = vmatpush1.bf16.msra.mxu0 0
    %57 = vmatprep.subr.bf16.mxu0 0
    %58 = vmatpush1.bf16.msra.mxu0 0
    %59 = vmatprep.subr.bf16.mxu0 0
    %60 = vmatpush1.bf16.msra.mxu0 0
    %61 = vmatprep.subr.bf16.mxu0 0
    %62 = vmatpush1.bf16.msra.mxu0 0
    %63 = vmatprep.subr.bf16.mxu0 0
    %64 = vmatpush1.bf16.msra.mxu0 0
    %65 = vmatprep.subr.bf16.mxu0 0
    %66 = vmatpush1.bf16.msra.mxu0 0
    %67 = vmatprep.subr.bf16.mxu0 0
    %68 = vmatpush1.bf16.msra.mxu0 0
    %69 = vmatprep.subr.bf16.mxu0 0
    %70 = vmatpush1.bf16.msra.mxu0 0
    %71 = vmatprep.subr.bf16.mxu0 0
    %72 = vmatpush1.bf16.msra.mxu0 0
    %73 = vmatprep.subr.bf16.mxu0 0
    %74 = vmatpush1.bf16.msra.mxu0 0
    %75 = vmatprep.subr.bf16.mxu0 0
    %76 = vmatpush1.bf16.msra.mxu0 0
    %77 = vmatprep.subr.bf16.mxu0 0
    %78 = vmatpush1.bf16.msra.mxu0 0
    %79 = vmatprep.subr.bf16.mxu0 0
    %80 = vmatpush1.bf16.msra.mxu0 0
    %81 = vmatprep.subr.bf16.mxu0 0
    %82 = vmatpush1.bf16.msra.mxu0 0
    %83 = vmatprep.mubr.bf16.mxu0 0
    %84 = vmatmul.mubr.bf16.gmra.mrb[0].mxu0 %v45
    %v85 = vpop.f32.mrb[0].mxu0
    %v86 = vadd.f32 %v36, %v85
    %v87 = vpop.f32.mrb[0].mxu0
    %v88 = vpop.f32.mrb[0].mxu0
    %v89 = vadd.f32 %v36, %v88
    %v90 = vpop.f32.mrb[0].mxu0
    %91 = vdwg.mxu0
    %v92 = vmax.f32 %v86, 0.0
    %v93 = vmax.f32 %v89, 0.0
    %v94 = vpack.c.bf16 %v93, %v92
    %v95 = vld [vmem:[%s3] sm:$0xf]
    %v96 = vld [vmem:[%s3 + $0x4] sm:$0xf]
    %v97 = vld [vmem:[%s3 + $0x8] sm:$0xf]
    %v98 = vld [vmem:[%s3 + $0xc] sm:$0xf]
    %v99 = vld [vmem:[%s3 + $0x10] sm:$0xf]
    %v100 = vld [vmem:[%s3 + $0x14] sm:$0xf]
    %v101 = vld [vmem:[%s3 + $0x18] sm:$0xf]
    %v102 = vld [vmem:[%s3 + $0x1c] sm:$0xf]
    %v103 = vld [vmem:[%s3 + $0x20] sm:$0xf]
    %v104 = vld [vmem:[%s3 + $0x24] sm:$0xf]
    %v105 = vld [vmem:[%s3 + $0x28] sm:$0xf]
    %v106 = vld [vmem:[%s3 + $0x2c] sm:$0xf]
    %v107 = vld [vmem:[%s3 + $0x30] sm:$0xf]
    %v108 = vld [vmem:[%s3 + $0x34] sm:$0xf]
    %v109 = vld [vmem:[%s3 + $0x38] sm:$0xf]
    %v110 = vld [vmem:[%s3 + $0x3c] sm:$0xf]
    %v111 = vld [vmem:[%s4] sm:$0x1]
    %v113 = vlaneseq
    %v114 = vshrl.u32 %v113, 7
    %v115 = vsub.s32 0, %v114
    %v116 = vrot.slane %v111, %v115
    %v134 = vunpack.c.l.b16 %v95
    %v135 = vunpack.c.l.b16 %v96
    %v136 = vunpack.c.l.b16 %v97
    %v137 = vunpack.c.l.b16 %v98
    %v138 = vunpack.c.l.b16 %v99
    %v139 = vunpack.c.l.b16 %v100
    %v140 = vunpack.c.l.b16 %v101
    %v141 = vunpack.c.l.b16 %v102
    %v142 = vunpack.c.l.b16 %v103
    %v143 = vunpack.c.l.b16 %v104
    %v144 = vunpack.c.l.b16 %v105
    %v145 = vunpack.c.l.b16 %v106
    %v146 = vunpack.c.l.b16 %v107
    %v147 = vunpack.c.l.b16 %v108
    %v148 = vunpack.c.l.b16 %v109
    %v149 = vunpack.c.l.b16 %v110
    %v150 = vpack.c.b16 %v135, %v134
    %v151 = vpack.c.b16 %v137, %v136
    %v152 = vpack.c.b16 %v139, %v138
    %v153 = vpack.c.b16 %v141, %v140
    %v154 = vpack.c.b16 %v143, %v142
    %v155 = vpack.c.b16 %v145, %v144
    %v156 = vpack.c.b16 %v147, %v146
    %v157 = vpack.c.b16 %v149, %v148
    %166 = vmatprep.subr.bf16.mxu0 0
    %167 = vmatpush1.bf16.msra.mxu0 %v150
    %168 = vmatprep.subr.bf16.mxu0 0
    %169 = vmatpush1.bf16.msra.mxu0 %v151
    %170 = vmatprep.subr.bf16.mxu0 0
    %171 = vmatpush1.bf16.msra.mxu0 %v152
    %172 = vmatprep.subr.bf16.mxu0 0
    %173 = vmatpush1.bf16.msra.mxu0 %v153
    %174 = vmatprep.subr.bf16.mxu0 0
    %175 = vmatpush1.bf16.msra.mxu0 %v154
    %176 = vmatprep.subr.bf16.mxu0 0
    %177 = vmatpush1.bf16.msra.mxu0 %v155
    %178 = vmatprep.subr.bf16.mxu0 0
    %179 = vmatpush1.bf16.msra.mxu0 %v156
    %180 = vmatprep.subr.bf16.mxu0 0
    %181 = vmatpush1.bf16.msra.mxu0 %v157
    %182 = vmatprep.subr.bf16.mxu0 0
    %183 = vmatpush1.bf16.msra.mxu0 0
    %184 = vmatprep.subr.bf16.mxu0 0
    %185 = vmatpush1.bf16.msra.mxu0 0
    %186 = vmatprep.subr.bf16.mxu0 0
    %187 = vmatpush1.bf16.msra.mxu0 0
    %188 = vmatprep.subr.bf16.mxu0 0
    %189 = vmatpush1.bf16.msra.mxu0 0
    %190 = vmatprep.subr.bf16.mxu0 0
    %191 = vmatpush1.bf16.msra.mxu0 0
    %192 = vmatprep.subr.bf16.mxu0 0
    %193 = vmatpush1.bf16.msra.mxu0 0
    %194 = vmatprep.subr.bf16.mxu0 0
    %195 = vmatpush1.bf16.msra.mxu0 0
    %196 = vmatprep.subr.bf16.mxu0 0
    %197 = vmatpush1.bf16.msra.mxu0 0
    %198 = vmatprep.mubr.bf16.mxu0 0
    %199 = vmatmul.mubr.bf16.gmra.mrb[0].mxu0 %v94
    %v200 = vpop.f32.mrb[0].mxu0
    %v201 = vadd.f32 %v116, %v200
    %v202 = vpop.f32.mrb[0].mxu0
    %v203 = vpop.f32.mrb[0].mxu0
    %v204 = vadd.f32 %v116, %v203
    %v205 = vpop.f32.mrb[0].mxu0
    %206 = vdwg.mxu0
    %v207 = vmax.f32 %v201, 0.0
    %v208 = vmax.f32 %v204, 0.0
    %v209 = vpack.c.bf16 %v208, %v207
    %v210 = vld [vmem:[%s5] sm:$0xff]
    %v211 = vld [vmem:[%s5 + $0x8] sm:$0xff]
    %v212 = vld [vmem:[%s5 + $0x10] sm:$0xff]
    %v213 = vld [vmem:[%s5 + $0x18] sm:$0xff]
    %v214 = vld [vmem:[%s5 + $0x20] sm:$0xff]
    %v215 = vld [vmem:[%s5 + $0x28] sm:$0xff]
    %v216 = vld [vmem:[%s5 + $0x30] sm:$0xff]
    %v217 = vld [vmem:[%s5 + $0x38] sm:$0xff]
    %v218 = vld [vmem:[%s5 + $0x40] sm:$0xff]
    %v219 = vld [vmem:[%s5 + $0x48] sm:$0xff]
    %v220 = vld [vmem:[%s5 + $0x50] sm:$0xff]
    %v221 = vld [vmem:[%s5 + $0x58] sm:$0xff]
    %v222 = vld [vmem:[%s5 + $0x60] sm:$0xff]
    %v223 = vld [vmem:[%s5 + $0x68] sm:$0xff]
    %v224 = vld [vmem:[%s5 + $0x70] sm:$0xff]
    %v225 = vld [vmem:[%s5 + $0x78] sm:$0xff]
    %v226 = vld [vmem:[%s6] sm:$0x3]
    %v228 = vlaneseq
    %v229 = vshrl.u32 %v228, 7
    %v230 = vsub.s32 0, %v229
    %v231 = vrot.slane %v226, %v230
    %v232 = vlaneseq
    %v233 = vshrl.u32 %v232, 7
    %v234 = vsub.s32 1, %v233
    %v235 = vrot.slane %v226, %v234
    %v254 = vunpack.c.l.b16 %v210
    %v255 = vunpack.c.h.b16 %v210
    %v256 = vunpack.c.l.b16 %v211
    %v257 = vunpack.c.h.b16 %v211
    %v258 = vunpack.c.l.b16 %v212
    %v259 = vunpack.c.h.b16 %v212
    %v260 = vunpack.c.l.b16 %v213
    %v261 = vunpack.c.h.b16 %v213
    %v262 = vunpack.c.l.b16 %v214
    %v263 = vunpack.c.h.b16 %v214
    %v264 = vunpack.c.l.b16 %v215
    %v265 = vunpack.c.h.b16 %v215
    %v266 = vunpack.c.l.b16 %v216
    %v267 = vunpack.c.h.b16 %v216
    %v268 = vunpack.c.l.b16 %v217
    %v269 = vunpack.c.h.b16 %v217
    %v270 = vunpack.c.l.b16 %v218
    %v271 = vunpack.c.h.b16 %v218
    %v272 = vunpack.c.l.b16 %v219
    %v273 = vunpack.c.h.b16 %v219
    %v274 = vunpack.c.l.b16 %v220
    %v275 = vunpack.c.h.b16 %v220
    %v276 = vunpack.c.l.b16 %v221
    %v277 = vunpack.c.h.b16 %v221
    %v278 = vunpack.c.l.b16 %v222
    %v279 = vunpack.c.h.b16 %v222
    %v280 = vunpack.c.l.b16 %v223
    %v281 = vunpack.c.h.b16 %v223
    %v282 = vunpack.c.l.b16 %v224
    %v283 = vunpack.c.h.b16 %v224
    %v284 = vunpack.c.l.b16 %v225
    %v285 = vunpack.c.h.b16 %v225
    %v286 = vpack.c.b16 %v256, %v254
    %v287 = vpack.c.b16 %v257, %v255
    %v288 = vpack.c.b16 %v260, %v258
    %v289 = vpack.c.b16 %v261, %v259
    %v290 = vpack.c.b16 %v264, %v262
    %v291 = vpack.c.b16 %v265, %v263
    %v292 = vpack.c.b16 %v268, %v266
    %v293 = vpack.c.b16 %v269, %v267
    %v294 = vpack.c.b16 %v272, %v270
    %v295 = vpack.c.b16 %v273, %v271
    %v296 = vpack.c.b16 %v276, %v274
    %v297 = vpack.c.b16 %v277, %v275
    %v298 = vpack.c.b16 %v280, %v278
    %v299 = vpack.c.b16 %v281, %v279
    %v300 = vpack.c.b16 %v284, %v282
    %v301 = vpack.c.b16 %v285, %v283
    %318 = vmatprep.subr.bf16.mxu0 %v287
    %319 = vmatpush1.bf16.msra.mxu0 %v286
    %320 = vmatprep.subr.bf16.mxu0 %v289
    %321 = vmatpush1.bf16.msra.mxu0 %v288
    %322 = vmatprep.subr.bf16.mxu0 %v291
    %323 = vmatpush1.bf16.msra.mxu0 %v290
    %324 = vmatprep.subr.bf16.mxu0 %v293
    %325 = vmatpush1.bf16.msra.mxu0 %v292
    %326 = vmatprep.subr.bf16.mxu0 %v295
    %327 = vmatpush1.bf16.msra.mxu0 %v294
    %328 = vmatprep.subr.bf16.mxu0 %v297
    %329 = vmatpush1.bf16.msra.mxu0 %v296
    %330 = vmatprep.subr.bf16.mxu0 %v299
    %331 = vmatpush1.bf16.msra.mxu0 %v298
    %332 = vmatprep.subr.bf16.mxu0 %v301
    %333 = vmatpush1.bf16.msra.mxu0 %v300
    %334 = vmatprep.subr.bf16.mxu0 0
    %335 = vmatpush1.bf16.msra.mxu0 0
    %336 = vmatprep.subr.bf16.mxu0 0
    %337 = vmatpush1.bf16.msra.mxu0 0
    %338 = vmatprep.subr.bf16.mxu0 0
    %339 = vmatpush1.bf16.msra.mxu0 0
    %340 = vmatprep.subr.bf16.mxu0 0
    %341 = vmatpush1.bf16.msra.mxu0 0
    %342 = vmatprep.subr.bf16.mxu0 0
    %343 = vmatpush1.bf16.msra.mxu0 0
    %344 = vmatprep.subr.bf16.mxu0 0
    %345 = vmatpush1.bf16.msra.mxu0 0
    %346 = vmatprep.subr.bf16.mxu0 0
    %347 = vmatpush1.bf16.msra.mxu0 0
    %348 = vmatprep.subr.bf16.mxu0 0
    %349 = vmatpush1.bf16.msra.mxu0 0
    %350 = vmatprep.mubr.bf16.mxu0 0
    %351 = vmatmul.mubr.bf16.gmra.mrb[0].mxu0 %v209
    %v352 = vpop.f32.mrb[0].mxu0
    %v353 = vadd.f32 %v231, %v352
    %v354 = vpop.f32.mrb[0].mxu0
    %v355 = vadd.f32 %v235, %v354
    %v356 = vpop.f32.mrb[0].mxu0
    %v357 = vadd.f32 %v231, %v356
    %v358 = vpop.f32.mrb[0].mxu0
    %v359 = vadd.f32 %v235, %v358
    %360 = vdwg.mxu0
    %v361 = vpack.c.bf16 %v357, %v353
    %v362 = vpack.c.bf16 %v359, %v355
    %v365 = vunpack.c.l.b16 %v361
    %v366 = vunpack.c.l.b16 %v362
    %v367 = vunpack.c.h.b16 %v361
    %v368 = vunpack.c.h.b16 %v362
    %v369 = vpack.c.b16 %v366, %v365
    %v370 = vpack.c.b16 %v368, %v367
    %vm373 = vcmask 621572
    %vm374 = vmor %vm373, %vm47
    %375 = vst.msk [vmem:[#allocation2] sm:$0xff] %vm374, %v369
    %376 = vst.msk [vmem:[#allocation2 + $0x8] sm:$0xff] %vm374, %v370
    // Predicated region
    $region30: #{tpu_custom_call.1} parent=1 // pred_check
      _
    $region31: #{tpu_custom_call.1} parent=1 // pred_check_branch
      %378 = sbr.rel (0) target = $region33
    $region32: #{tpu_custom_call.1} parent=1 // pred_region
      %s380 = ssub.s32 256, 256
      %381 = vsyncadd [#allocation3], %s380
      %s382 = sshll.u32 [#allocation2], 4
      %s383 = int_to_ptr.vmem [resolvable:$true] %s382
      %388 = dma.vmem_to_hbm [thread:$0]  %s383, 256, %s7, [#allocation3], 128, 128, 8
    $region33: #{tpu_custom_call.1} parent=1 // pred_fallthru
      _
    // Predicated region
    $region34: #{tpu_custom_call.1} parent=1 // pred_check
      _
    $region35: #{tpu_custom_call.1} parent=1 // pred_check_branch
      %390 = sbr.rel (0) target = $region37
    $region36: #{tpu_custom_call.1} parent=1 // pred_region
      %391 = dma.done [#allocation3], 256
    $region37: #{tpu_custom_call.1} parent=1 // pred_fallthru
      _
    %392 = vsyncpa [#allocation3], 1

</llo_original>
